<compile_context>
chip_gen: v6e
topology: v6e:2x2x1
jax: 0.10.0
libtpu: 0.0.40
codegen_flags: <defaults>
</compile_context>

<pallas_src>
import jax
import jax.numpy as jnp
from jax.experimental import pallas as pl
from jax.experimental.pallas import tpu as pltpu

_LANES = 128


def _cdiv(a: int, b: int) -> int:
    return -(-a // b)


def _round_up(x: int, m: int) -> int:
    return _cdiv(x, m) * m


def _pick_block_rows(rows: int, requested: int) -> int:
    """Block-row heuristic: big blocks, but never a 1-step grid on real work."""
    br = max(8, min(int(requested), 4096))          # 4096*128*4B = 2 MiB/buffer (v5e-safe)
    br = (br // 8) * 8                              # sublane-aligned block dim
    br = min(br, _round_up(rows, 8))                # never bigger than the array
    if rows > 8:
        # >= 2 grid steps so v7x megacore can shard the "parallel" axis.
        br = min(br, max(8, _round_up(_cdiv(rows, 2), 8)))
    if rows >= 2048:
        # >= 4 steps keeps per-core double-buffering busy; blocks stay >= 512
        # rows (the measured ~85%-of-roofline regime for streaming kernels).
        br = min(br, max(512, _round_up(_cdiv(rows, 4), 8)))
    return max(8, br)


def _testnet_lcp_kernel(params_ref, vk_ref, out_ref):
    # params_ref : SMEM (3,) = [cx, cy, mu]  with  [cx, cy] = g + u / mass
    # vk_ref/out_ref : VMEM (block_rows, 128) lane-dense view of the flat
    #                  [x0, y0, x1, y1, ...] stream (even lane = x, odd lane = y).
    cx = params_ref[0]
    cy = params_ref[1]
    mu = params_ref[2]

    # Lane-parity machinery at (1, 128): one vreg of VALU work per grid step
    # (instead of per (8,128) vreg of the block); broadcasts along sublanes.
    lane = jax.lax.broadcasted_iota(jnp.int32, (1, _LANES), dimension=1)
    is_x = (lane & 1) == 0                                    # even lane = x
    add_row = jnp.where(is_x, cx, cy)                         # [cx, cy, cx, cy, ...]

    vk = vk_ref[...]                                          # (R, 128) f32
    # free velocity vf = vk + g + u/mass  (per-lane additive constant by parity)
    vf = vk + add_row

    # Bring each pair's y value onto its x lane: lane i <- lane i+1 (XLU slot,
    # free next to the VPU work). shift = 127 == -1 (mod 128). Lane 127 wraps
    # back to lane 0 of the same row; that is safe ONLY because vf_y is consumed
    # on even (x) lanes — keep this invariant if the layout/mask ever changes.
    vf_y = pltpu.roll(vf, shift=127, axis=1)

    # x lanes: Coulomb friction  x_x = vf_x - clip(vf_x, -cap, cap), cap >= 0.
    cap = mu * jnp.maximum(-vf_y, 0.0)
    new_vx = vf - jnp.clip(vf, -cap, cap)
    # y lanes: non-penetration   x_y = max(vf_y, 0)
    new_vy = jnp.maximum(vf, 0.0)

    # single full-width (unmasked) store
    out_ref[...] = jnp.where(is_x, new_vx, new_vy)


def test_net_forward(prev_vels, mass=1.0, mu=2.9, *, block_rows=4096):
    """Batched TestNet forward: prev_vels (N, 2) -> next_vels (N, 2)."""
    prev_vels = jnp.asarray(prev_vels, dtype=jnp.float32)
    n = prev_vels.shape[0]
    total = 2 * n

    # Lane-dense view of the contiguous (N, 2) buffer: free metadata reshape
    # (no transpose). Pad only to the next 128-lane row — the partial last
    # grid block is handled by Pallas via masked boundary DMA, so N % 64 == 0
    # is fully zero-copy on both input and output.
    rows = max(1, _cdiv(total, _LANES))
    flat = prev_vels.reshape(-1)
    pad = rows * _LANES - total
    if pad:  # slow path: one copy of < 1 row of padding, only when 2*N % 128 != 0
        flat = jnp.pad(flat, (0, pad))
    x2d = flat.reshape(rows, _LANES)

    block_rows = _pick_block_rows(rows, block_rows)
    grid = (_cdiv(rows, block_rows),)     # last block may be partial -> masked

    # Hoisted scalar constants: vf = vk + (g + u / mass); mass cancels elsewhere.
    mass = jnp.asarray(mass, jnp.float32).reshape(())
    mu = jnp.asarray(mu, jnp.float32).reshape(())
    g = jnp.array([0.0, -1.0], jnp.float32)
    u = jnp.array([2.0, 0.0], jnp.float32)
    params = jnp.concatenate([g + u / mass, mu[None]])        # [cx, cy, mu]

    out2d = pl.pallas_call(
        _testnet_lcp_kernel,
        grid=grid,
        out_shape=jax.ShapeDtypeStruct((rows, _LANES), jnp.float32),
        in_specs=[
            pl.BlockSpec(memory_space=pltpu.MemorySpace.SMEM),        # [cx, cy, mu]
            pl.BlockSpec((block_rows, _LANES), lambda i: (i, 0)),     # velocities
        ],
        out_specs=pl.BlockSpec((block_rows, _LANES), lambda i: (i, 0)),
        compiler_params=pltpu.CompilerParams(
            dimension_semantics=("parallel",),
        ),
        cost_estimate=pl.CostEstimate(
            flops=10 * rows * _LANES,
            transcendentals=0,
            bytes_accessed=2 * rows * _LANES * 4,                    # read + write
        ),
    )(params, x2d)

    if pad:
        return out2d.reshape(-1)[:total].reshape(n, 2)
    return out2d.reshape(n, 2)                                        # free reshape


def _testnet_reference(prev_vels, mass=1.0, mu=2.9):
    """Pure-jnp reference of the closed-form LCP solution (for checking)."""
    prev_vels = jnp.asarray(prev_vels, jnp.float32)
    g = jnp.array([0.0, -1.0], jnp.float32)
    u = jnp.array([2.0, 0.0], jnp.float32)
    vf = prev_vels + g + u / jnp.float32(mass)
    vfx, vfy = vf[:, 0], vf[:, 1]
    new_vy = jnp.maximum(vfy, 0.0)
    cap = jnp.float32(mu) * jnp.maximum(-vfy, 0.0)
    new_vx = jnp.sign(vfx) * jnp.maximum(jnp.abs(vfx) - cap, 0.0)
    return jnp.stack([new_vx, new_vy], axis=1)


if __name__ == "__main__":
    key = jax.random.PRNGKey(0)

    # N = 300: not a multiple of 64 -> exercises the padded slow path and the
    # masked partial last grid block.
    N = 300
    prev_vels = jax.random.normal(key, (N, 2), dtype=jnp.float32)
    # Row 0 = canonical test input from test.py: prev_vels = [[1., 0.]]
    prev_vels = prev_vels.at[0].set(jnp.array([1.0, 0.0], dtype=jnp.float32))

    next_vels = jax.block_until_ready(test_net_forward(prev_vels, mass=1.0, mu=2.9))

    # Sanity: vk=[1,0] -> free vel [3,-1] -> normal impulse 1, friction capped
    # at mu=2.9 -> next vel [0.1, 0].
    expected_row0 = jnp.array([0.1, 0.0], dtype=jnp.float32)
    assert jnp.allclose(next_vels[0], expected_row0, atol=1e-5), next_vels[0]
    ref = _testnet_reference(prev_vels, mass=1.0, mu=2.9)
    assert jnp.allclose(next_vels, ref, atol=1e-5), float(jnp.max(jnp.abs(next_vels - ref)))

    # N = 256: multiple of 64 -> zero-copy fast path (no pad, no output slice).
    prev_vels2 = jax.random.normal(jax.random.PRNGKey(1), (256, 2), dtype=jnp.float32)
    out2 = jax.block_until_ready(test_net_forward(prev_vels2, mass=1.0, mu=2.9))
    ref2 = _testnet_reference(prev_vels2, mass=1.0, mu=2.9)
    assert jnp.allclose(out2, ref2, atol=1e-5), float(jnp.max(jnp.abs(out2 - ref2)))

    print("KERNEL_OK")
</pallas_src>

<mosaic_0001>
module attributes {stable_mosaic.version = 11 : i64} {
  func.func @_testnet_lcp_kernel(%arg0: i32, %arg1: memref<3xf32, #tpu.memory_space<smem>>, %arg2: memref<8x128xf32, #tpu.memory_space<vmem>>, %arg3: memref<8x128xf32, #tpu.memory_space<vmem>>) attributes {dimension_semantics = [#tpu.dimension_semantics<parallel>], iteration_bounds = array<i64: 1>, scalar_prefetch = 0 : i64, scratch_operands = 0 : i64, tpu.core_type = #tpu.core_type<tc>, window_params = [{transform_indices = @transform_0, window_bounds = array<i64: 3>}, {transform_indices = @transform_1, window_bounds = array<i64: 8, 128>}, {transform_indices = @transform_2, window_bounds = array<i64: 8, 128>}]} {
    %c0 = arith.constant 0 : index
    %0 = memref.load %arg1[%c0] : memref<3xf32, #tpu.memory_space<smem>>
    %c1 = arith.constant 1 : index
    %1 = memref.load %arg1[%c1] : memref<3xf32, #tpu.memory_space<smem>>
    %c2 = arith.constant 2 : index
    %2 = memref.load %arg1[%c2] : memref<3xf32, #tpu.memory_space<smem>>
    %3 = tpu.iota {dimensions = array<i32: 1>} : vector<1x128xi32>
    %c1_i32 = arith.constant 1 : i32
    %4 = vector.broadcast %c1_i32 : i32 to vector<1x128xi32>
    %5 = arith.andi %3, %4 : vector<1x128xi32>
    %c0_i32 = arith.constant 0 : i32
    %6 = vector.broadcast %c0_i32 : i32 to vector<1x128xi32>
    %7 = arith.cmpi eq, %5, %6 : vector<1x128xi32>
    %8 = vector.broadcast %0 : f32 to vector<1x128xf32>
    %9 = vector.broadcast %1 : f32 to vector<1x128xf32>
    %10 = arith.select %7, %8, %9 : vector<1x128xi1>, vector<1x128xf32>
    %c0_0 = arith.constant 0 : index
    %c0_1 = arith.constant 0 : index
    %11 = vector.load %arg2[%c0_0, %c0_1] : memref<8x128xf32, #tpu.memory_space<vmem>>, vector<8x128xf32>
    %12 = vector.broadcast %10 : vector<1x128xf32> to vector<8x128xf32>
    %13 = arith.addf %11, %12 : vector<8x128xf32>
    %c127_i32 = arith.constant 127 : i32
    %14 = tpu.dynamic_rotate %13 by %c127_i32 dim 1 : vector<8x128xf32>, i32 -> vector<8x128xf32>
    %cst = arith.constant 0.000000e+00 : f32
    %15 = vector.broadcast %cst : f32 to vector<8x128xf32>
    %16 = arith.subf %15, %14 : vector<8x128xf32>
    %cst_2 = arith.constant 0.000000e+00 : f32
    %17 = vector.broadcast %cst_2 : f32 to vector<8x128xf32>
    %18 = arith.maximumf %16, %17 : vector<8x128xf32>
    %19 = vector.broadcast %2 : f32 to vector<8x128xf32>
    %20 = arith.mulf %19, %18 : vector<8x128xf32>
    %cst_3 = arith.constant 0.000000e+00 : f32
    %21 = vector.broadcast %cst_3 : f32 to vector<8x128xf32>
    %22 = arith.subf %21, %20 : vector<8x128xf32>
    %23 = arith.maximumf %22, %13 : vector<8x128xf32>
    %24 = arith.minimumf %20, %23 : vector<8x128xf32>
    %25 = arith.subf %13, %24 : vector<8x128xf32>
    %cst_4 = arith.constant 0.000000e+00 : f32
    %26 = vector.broadcast %cst_4 : f32 to vector<8x128xf32>
    %27 = arith.maximumf %13, %26 : vector<8x128xf32>
    %28 = vector.shape_cast %7 : vector<1x128xi1> to vector<1x128xi1>
    %29 = vector.broadcast %28 : vector<1x128xi1> to vector<8x128xi1>
    %30 = arith.select %29, %25, %27 : vector<8x128xi1>, vector<8x128xf32>
    %c0_5 = arith.constant 0 : index
    %c0_6 = arith.constant 0 : index
    %31 = vector.load %arg3[%c0_5, %c0_6] : memref<8x128xf32, #tpu.memory_space<vmem>>, vector<8x128xf32>
    tpu.vector_store %arg3[%c0_5, %c0_6], %30 {strides = array<i32>} : memref<8x128xf32, #tpu.memory_space<vmem>>, vector<8x128xf32>,
    return
  }
  func.func @transform_0(%arg0: i32) -> i32 {
    %c0_i32 = arith.constant 0 : i32
    %c0_i32_0 = arith.constant 0 : i32
    return %c0_i32 : i32
  }
  func.func @transform_1(%arg0: i32) -> (i32, i32) {
    %c0_i32 = arith.constant 0 : i32
    %c0_i32_0 = arith.constant 0 : i32
    return %arg0, %c0_i32 : i32, i32
  }
  func.func @transform_2(%arg0: i32) -> (i32, i32) {
    %c0_i32 = arith.constant 0 : i32
    %c0_i32_0 = arith.constant 0 : i32
    return %arg0, %c0_i32 : i32, i32
  }
}

</mosaic_0001>

<llo_original>
// kernel: tpu_custom_call.1
$region0: #{tpu_custom_call.1}
  #allocation0 [shape = 'u32[]', space=smem, size = 0x4, offset = 0x4, fixed_abs, tag = 'smem constant byte address 0x4 - core index']
  #allocation1 [shape = 'u32[144,128]{1,0:T(1,128)}', space=vmem, size = 0x12000, scoped, tag = 'internal scratch']
  %s0 = inlined_call_operand.hbm [shape: f32[3], index: 0, kind: input, shape index: {}]
  %s1 = inlined_call_operand.hbm [shape: f32[5,128], index: 1, kind: input, shape index: {}]
  %s2 = inlined_call_operand.hbm [shape: f32[5,128], index: 2, kind: output, shape index: {}]
  %s3 = sld [smem:[#allocation0]]
  $region26: #{tpu_custom_call.1} parent=0
    _
  %s5 = ssub.s32 1, %s3
  %s6 = scalar_select 0, %s5, %s3
  $region1: #{tpu_custom_call.1} parent=0
    #allocation2 [shape = 'u8[512]{0}', space=smem, size = 0x200, scoped, tag = 'input window, operand 0, single buffered']
    #allocation3 [shape = 's32[1]{0}', space=sflag, size = 0x4, scoped, tag = 'scoped memory for tpu_custom_call.1']
    #allocation4 [shape = 's32[1]{0}', space=sflag, size = 0x4, scoped, tag = 'scoped memory for tpu_custom_call.1']
    #allocation5 [shape = 's32[1]{0}', space=sflag, size = 0x4, scoped, tag = 'scoped memory for tpu_custom_call.1']
    #allocation6 [shape = 'u8[4096]{0}', space=vmem, size = 0x1000, scoped, tag = 'input window, operand 1, single buffered']
    #allocation7 [shape = 'u8[4096]{0}', space=vmem, size = 0x1000, scoped, tag = 'output window, operand 0, single buffered']
    %7 = vsyncpa [#allocation5], 0
    %8 = vsyncpa [#allocation3], 0
    %9 = vsyncpa [#allocation4], 0
    // Predicated region
    $region2: #{tpu_custom_call.1} parent=1 // pred_check
      _
    $region3: #{tpu_custom_call.1} parent=1 // pred_check_branch
      %11 = sbr.rel (0) target = $region5
    $region4: #{tpu_custom_call.1} parent=1 // pred_region
      %s13 = ssub.s32 16, 16
      %14 = vsyncadd [#allocation5], %s13
      %17 = dma.hbm_to_smem %s0, 16, [#allocation2], [#allocation5]
    $region5: #{tpu_custom_call.1} parent=1 // pred_fallthru
      _
    // Predicated region
    $region6: #{tpu_custom_call.1} parent=1 // pred_check
      _
    $region7: #{tpu_custom_call.1} parent=1 // pred_check_branch
      %19 = sbr.rel (0) target = $region9
    $region8: #{tpu_custom_call.1} parent=1 // pred_region
      %s21 = ssub.s32 128, 128
      %22 = vsyncadd [#allocation3], %s21
      %s24 = sshll.u32 [#allocation6], 4
      %s25 = int_to_ptr.vmem [resolvable:$true] %s24
      %27 = dma.hbm_to_vmem [thread:$0]  %s1, 128, %s25, [#allocation3]
    $region9: #{tpu_custom_call.1} parent=1 // pred_fallthru
      _
    // Predicated region
    $region10: #{tpu_custom_call.1} parent=1 // pred_check
      _
    $region11: #{tpu_custom_call.1} parent=1 // pred_check_branch
      %29 = sbr.rel (0) target = $region13
    $region12: #{tpu_custom_call.1} parent=1 // pred_region
      %30 = dma.done [#allocation5], 16
    $region13: #{tpu_custom_call.1} parent=1 // pred_fallthru
      _
    // Predicated region
    $region14: #{tpu_custom_call.1} parent=1 // pred_check
      _
    $region15: #{tpu_custom_call.1} parent=1 // pred_check_branch
      %32 = sbr.rel (0) target = $region17
    $region16: #{tpu_custom_call.1} parent=1 // pred_region
      %33 = dma.done [#allocation3], 128
    $region17: #{tpu_custom_call.1} parent=1 // pred_fallthru
      _
    %34 = sfence
    %s35 = sld [smem:[#allocation2]]
    %s36 = sld [smem:[#allocation2 + $0x1]]
    %s37 = sld [smem:[#allocation2 + $0x2]]
    %v38 = vlaneseq
    %v39 = vand.u32 %v38, 127
    %v40 = vand.u32 %v39, 1
    %vm41 = vcmp.eq.s32.totalorder %v40, 0
    %v42 = vstv %s35
    %v43 = vstv %s36
    %v44 = vsel %vm41, %v42, %v43
    %v45 = vld [vmem:[#allocation6] sm:$0xff]
    %v46 = vadd.f32 %v45, %v44
    %47 = vrot.lane.b32.xlu0 %v46, 127
    %v48 = vpop.permute.xlu0 %47
    %v49 = vsub.f32 0.0, %v48
    %v50 = vmax.f32 %v49, 0.0
    %v51 = vstv %s37
    %v52 = vmul.f32 %v51, %v50
    %v53 = vsub.f32 0.0, %v52
    %v54 = vmax.f32 %v53, %v46
    %v55 = vmin.f32 %v52, %v54
    %v56 = vsub.f32 %v46, %v55
    %v57 = vmax.f32 %v46, 0.0
    %v58 = vsel %vm41, 1, 0
    %vm59 = vcmp.eq.s32.totalorder %v58, 1
    %v60 = vsel %vm59, %v56, %v57
    %61 = vst [vmem:[#allocation7] sm:$0xff] %v60
    // Predicated region
    $region18: #{tpu_custom_call.1} parent=1 // pred_check
      _
    $region19: #{tpu_custom_call.1} parent=1 // pred_check_branch
      %63 = sbr.rel (0) target = $region21
    $region20: #{tpu_custom_call.1} parent=1 // pred_region
      %s65 = ssub.s32 128, 128
      %66 = vsyncadd [#allocation4], %s65
      %s68 = sshll.u32 [#allocation7], 4
      %s69 = int_to_ptr.vmem [resolvable:$true] %s68
      %71 = dma.vmem_to_hbm [thread:$0]  %s69, 128, %s2, [#allocation4]
    $region21: #{tpu_custom_call.1} parent=1 // pred_fallthru
      _
    // Predicated region
    $region22: #{tpu_custom_call.1} parent=1 // pred_check
      _
    $region23: #{tpu_custom_call.1} parent=1 // pred_check_branch
      %73 = sbr.rel (0) target = $region25
    $region24: #{tpu_custom_call.1} parent=1 // pred_region
      %74 = dma.done [#allocation4], 128
    $region25: #{tpu_custom_call.1} parent=1 // pred_fallthru
      _
    %75 = vsyncpa [#allocation3], 1
    %76 = vsyncpa [#allocation4], 1
    %77 = vsyncpa [#allocation5], 1

</llo_original>
